<compile_context>
chip_gen: v6e
topology: v6e:2x2x1
jax: 0.10.0
libtpu: 0.0.40
codegen_flags: <defaults>
</compile_context>

<pallas_src>
import jax
import jax.numpy as jnp
from jax.experimental import pallas as pl
from jax.experimental.pallas import tpu as pltpu


def _round_up(x, m):
    return ((x + m - 1) // m) * m


def _sublane_tile(dtype):
    """Native sublane tile: 8 for 32-bit, 16 for 16-bit, 32 for 8-bit dtypes."""
    return 8 * max(1, 4 // jnp.dtype(dtype).itemsize)


def _vmem_budget_and_limit():
    """Generation-aware VMEM sizing (v5e/v6e: 128 MiB physical; v7x: 64 MiB per TC)."""
    try:
        cap = int(pltpu.get_tpu_info().vmem_capacity_bytes)
    except Exception:
        cap = 64 * 1024 * 1024
    limit = min((cap * 3) // 4, 64 * 1024 * 1024)
    budget = max(2 * 1024 * 1024, min(cap // 4, 24 * 1024 * 1024))
    budget = min(budget, limit // 2)   # leave headroom under the scoped limit
    return budget, limit


def _plan_nc_block(nc, H, W, specs, in_dtype, compute_dtype, budget_bytes):
    """Largest N*C chunk whose padded, double-buffered working set fits the budget,
    capped so the grid keeps >= 2 (ideally ~8) steps for pipelining / megacore."""
    it_in = jnp.dtype(in_dtype).itemsize
    it_c = jnp.dtype(compute_dtype).itemsize
    sub_in = _sublane_tile(in_dtype)
    sub_c = _sublane_tile(compute_dtype)
    ho_max = max(ho for (_, _, ho, _) in specs)
    # Per-(N*C)-row VMEM bytes including (sublane, lane) tile padding.
    # x2 for every pipelined (double-buffered) operand, x1 for the persistent scratch.
    in_bytes = _round_up(H, sub_in) * _round_up(W, 128) * it_in * 2
    out_bytes = sum(_round_up(ho, sub_in) * _round_up(wo, 128) * it_in * 2
                    for (_, _, ho, wo) in specs)
    scr_bytes = _round_up(W, sub_c) * _round_up(ho_max, 128) * it_c
    per_nc = in_bytes + out_bytes + scr_bytes
    cap = max(1, budget_bytes // per_nc)
    bnc = min(cap, nc)
    if nc >= 2:
        bnc = min(bnc, -(-nc // 2))                # guarantee >= 2 grid steps
        want8 = max(1, -(-nc // min(nc, 8)))       # aim for ~8 steps ...
        if want8 * per_nc >= 256 * 1024:           # ... while blocks stay >= ~256 KiB
            bnc = min(bnc, want8)
    return bnc, ho_max


def _make_pool_kernel(specs, mode):
    """Fused kernel over all unique pooling geometries.

    Refs:
      x_ref : (bnc, H, W) input block in its natural layout (W = lanes, H = sublanes)
      per spec l = (kh, kw, ho, wo): one output ref of shape (bnc, ho, wo)
      scr   : VMEM scratch (bnc, W, ho_max) staging the width-window reduction
    """
    n_out = len(specs)

    def kernel(x_ref, *rest):
        out_refs = rest[:n_out]
        scr = rest[n_out]
        full_h = x_ref.shape[1]

        for (kh, kw, ho, wo), o_ref in zip(specs, out_refs):
            # ---- height windows: strided *sublane* reads straight off the input block
            if kh == full_h:
                # full-height pooling (temporal method): plain sublane reduction
                v = x_ref[...]
                if mode == 'max':
                    y = jnp.max(v, axis=1, keepdims=True)
                else:
                    y = jnp.sum(v.astype(jnp.float32), axis=1, keepdims=True)
            else:
                def hrow(j):
                    return x_ref[:, pl.ds(j, ho, stride=kh), :]
                if mode == 'max':                       # keep native dtype for max
                    y = hrow(0)
                    for j in range(1, kh):
                        y = jnp.maximum(y, hrow(j))
                else:                                   # avg accumulates in f32
                    y = hrow(0).astype(jnp.float32)
                    for j in range(1, kh):
                        y = y + hrow(j).astype(jnp.float32)
            # y: (bnc, ho, W)

            # ---- move W off the lane axis (minor-dim swap; XLU slot is idle) and stage
            #      in VMEM so the width windows are also strided *sublane* reads.
            scr[:, :, pl.ds(0, ho)] = jnp.swapaxes(y, 1, 2).astype(scr.dtype)

            def wcol(j):
                return scr[:, pl.ds(j, wo, stride=kw), pl.ds(0, ho)]

            if mode == 'max':
                r = wcol(0)
                for j in range(1, kw):
                    r = jnp.maximum(r, wcol(j))
            else:
                r = wcol(0)
                for j in range(1, kw):
                    r = r + wcol(j)
                r = r * (1.0 / float(kh * kw))
            # r: (bnc, wo, ho) -> swap the (small) pooled tile back to (ho, wo) order so
            # the wrapper-side (NC, ho, wo) -> (N, C, ho*wo) reshape is free.
            o_ref[...] = jnp.swapaxes(r, 1, 2).astype(o_ref.dtype)

    return kernel


def pyramid_pool(x, levels, mode='max', method='spatial'):
    """Equivalent of PyramidPooling.pool for x of shape (N, C, H, W)."""
    if mode not in ('max', 'avg'):
        raise RuntimeError('Unknown pooling type: %s, please use "max" or "avg".' % mode)
    method = method.lower()
    assert method in ('spatial', 'temporal')
    N, C, H, W = x.shape
    nc = N * C
    dtype = x.dtype

    # Per-level pooling geometry (torch's pad amounts are all zero as written).
    geoms = []
    for level in levels:
        kw = int(level)
        kh = int(level) if method == 'spatial' else H
        geoms.append((kh, kw))

    # Unique, non-identity geometries: spatial level==1 is the identity (pure reshape);
    # DownBlock's duplicate levels are computed once and reused at concat time.
    uniq = []
    for g in geoms:
        if g == (1, 1) or g in uniq:
            continue
        assert g[0] <= H and g[1] <= W, 'pooling level larger than spatial extent'
        uniq.append(g)

    pooled = {}
    if uniq:
        specs = tuple((kh, kw, H // kh, W // kw) for (kh, kw) in uniq)
        compute_dtype = jnp.float32 if mode == 'avg' else dtype
        budget, vmem_limit = _vmem_budget_and_limit()
        bnc, ho_max = _plan_nc_block(nc, H, W, specs, dtype, compute_dtype, budget)
        grid = (pl.cdiv(nc, bnc),)

        x_flat = x.reshape(nc, H, W)   # free row-major reshape; read once, natural layout

        in_specs = [pl.BlockSpec((bnc, H, W), lambda c: (c, 0, 0))]
        out_specs = tuple(pl.BlockSpec((bnc, ho, wo), lambda c: (c, 0, 0))
                          for (_, _, ho, wo) in specs)
        out_shapes = tuple(jax.ShapeDtypeStruct((nc, ho, wo), dtype)
                           for (_, _, ho, wo) in specs)

        results = pl.pallas_call(
            _make_pool_kernel(specs, mode),
            out_shape=out_shapes,
            grid=grid,
            in_specs=in_specs,
            out_specs=out_specs,
            scratch_shapes=[pltpu.VMEM((bnc, W, ho_max), compute_dtype)],
            compiler_params=pltpu.CompilerParams(
                dimension_semantics=("parallel",),     # N*C chunks are independent
                vmem_limit_bytes=vmem_limit),
        )(x_flat)
        if not isinstance(results, (tuple, list)):
            results = (results,)

        for (kh, kw, ho, wo), res in zip(specs, results):
            # (NC, ho, wo) -> (N, C, ho*wo) is a free reshape (no transpose needed).
            pooled[(kh, kw)] = res.reshape(N, C, ho * wo)

    outs = []
    identity = None
    for g in geoms:
        if g == (1, 1):
            if identity is None:
                identity = x.reshape(N, C, H * W)   # spatial level==1 pooling is identity
            outs.append(identity)
        else:
            outs.append(pooled[g])
    return jnp.concatenate(outs, axis=2)


def get_output_size(levels, method='spatial'):
    # Mirrors the torch code as written. NOTE (flagged in review): inconsistent with the
    # actual pooled output size sum((H//L)*(W//L)); do not size downstream layers from it.
    out = 0
    for level in levels:
        out += level * (level if method == 'spatial' else 1)
    return out


def pyramid_pooling_forward(x, levels, channels=1, mode='max', method='spatial',
                            compress_single_dimensions=True):
    """Mirror of PyramidPooling.forward for 2D/3D/4D inputs."""
    assert 2 <= x.ndim <= 4
    if x.ndim == 2:
        n, c = 1, 1
    elif x.ndim == 3:
        if channels == 1:
            n, c = x.shape[0], 1
        else:
            n, c = 1, x.shape[0]
    else:
        n, c = x.shape[0], x.shape[1]
    h, w = x.shape[-2], x.shape[-1]
    result = pyramid_pool(x.reshape(n, c, h, w), levels, mode, method)
    if compress_single_dimensions:
        if n == 1 and c == 1:
            return result.reshape(-1)
        elif n == 1:
            return result.reshape(c, -1)
        elif c == 1:
            return result.reshape(n, -1)
    return result


def _reference(x, levels, mode='max', method='spatial'):
    """Pure-JAX reference for correctness checking."""
    N, C, H, W = x.shape
    outs = []
    for level in levels:
        kh = level if method == 'spatial' else H
        kw = level
        ho, wo = H // kh, W // kw
        xr = x[:, :, :ho * kh, :wo * kw].reshape(N, C, ho, kh, wo, kw)
        p = xr.max(axis=(3, 5)) if mode == 'max' else xr.mean(axis=(3, 5))
        outs.append(p.reshape(N, C, -1))
    return jnp.concatenate(outs, axis=2)


if __name__ == "__main__":
    key = jax.random.PRNGKey(0)
    # PyramidPooling has no learned parameters; only the input tensor is needed.
    x = jax.random.normal(key, (2, 4, 16, 16), dtype=jnp.float32)  # NCHW like PyTorch

    # 1) level==1 identity fast-path + fused multi-level kernel (max, spatial)
    levels = [1, 2, 4]
    out = jax.block_until_ready(
        pyramid_pooling_forward(x, levels, channels=4, mode='max', method='spatial'))
    expected_last = sum((16 // L) * (16 // L) for L in levels)  # 256 + 64 + 16 = 336
    assert out.shape == (2, 4, expected_last), out.shape
    ref = _reference(x, levels, mode='max', method='spatial')
    assert jnp.allclose(out, ref, atol=1e-6), "max mismatch vs reference"

    # 2) DownBlock's actual level list (duplicates are deduplicated inside the kernel)
    db_levels = [2, 2, 4, 4, 4, 4, 4, 4, 4, 4]
    out_db = jax.block_until_ready(
        pyramid_pooling_forward(x, db_levels, channels=4, mode='max', method='spatial'))
    assert out_db.shape == (2, 4, sum((16 // L) * (16 // L) for L in db_levels)), out_db.shape
    ref_db = _reference(x, db_levels, mode='max', method='spatial')
    assert jnp.allclose(out_db, ref_db, atol=1e-6), "DownBlock-levels mismatch vs reference"

    # 3) avg mode (float32 accumulation path)
    out_avg = jax.block_until_ready(
        pyramid_pooling_forward(x, levels, channels=4, mode='avg', method='spatial'))
    ref_avg = _reference(x, levels, mode='avg', method='spatial')
    assert jnp.allclose(out_avg, ref_avg, atol=1e-5), "avg mismatch vs reference"

    # 4) explicit partial-block test: N*C = 15 is not a multiple of the chosen block,
    #    exercising Pallas' masked handling of the last grid step.
    x3 = jax.random.normal(jax.random.PRNGKey(0), (3, 5, 16, 16), dtype=jnp.float32)
    out_p = jax.block_until_ready(
        pyramid_pooling_forward(x3, [2, 4], channels=5, mode='max', method='spatial'))
    ref_p = _reference(x3, [2, 4], mode='max', method='spatial')
    assert out_p.shape == (3, 5, 64 + 16), out_p.shape
    assert jnp.allclose(out_p, ref_p, atol=1e-6), "partial-block mismatch vs reference"

    print("KERNEL_OK")
</pallas_src>

<mosaic_0001>
module attributes {stable_mosaic.version = 11 : i64} {
  func.func @kernel(%arg0: i32, %arg1: memref<4x16x16xf32, #tpu.memory_space<vmem>>, %arg2: memref<4x8x8xf32, #tpu.memory_space<vmem>>, %arg3: memref<4x4x4xf32, #tpu.memory_space<vmem>>, %arg4: memref<4x16x8xf32, #tpu.memory_space<vmem>>) attributes {dimension_semantics = [#tpu.dimension_semantics<parallel>], iteration_bounds = array<i64: 2>, scalar_prefetch = 0 : i64, scratch_operands = 1 : i64, tpu.core_type = #tpu.core_type<tc>, window_params = [{transform_indices = @transform_0, window_bounds = array<i64: 4, 16, 16>}, {transform_indices = @transform_1, window_bounds = array<i64: 4, 8, 8>}, {transform_indices = @transform_2, window_bounds = array<i64: 4, 4, 4>}]} {
    %c0 = arith.constant 0 : index
    %c0_0 = arith.constant 0 : index
    %c0_1 = arith.constant 0 : index
    %0 = tpu.strided_load %arg1[%c0, %c0_0, %c0_1] {strides = array<i32: 1, 2, 1>} : memref<4x16x16xf32, #tpu.memory_space<vmem>>, vector<4x8x16xf32>
    %c0_2 = arith.constant 0 : index
    %c1 = arith.constant 1 : index
    %c0_3 = arith.constant 0 : index
    %1 = tpu.strided_load %arg1[%c0_2, %c1, %c0_3] {strides = array<i32: 1, 2, 1>} : memref<4x16x16xf32, #tpu.memory_space<vmem>>, vector<4x8x16xf32>
    %2 = arith.maximumf %0, %1 : vector<4x8x16xf32>
    %3 = tpu.transpose %2, [0, 2, 1] : vector<4x8x16xf32> -> vector<4x16x8xf32>
    %c0_4 = arith.constant 0 : index
    %c0_5 = arith.constant 0 : index
    %c0_6 = arith.constant 0 : index
    %4 = vector.load %arg4[%c0_4, %c0_5, %c0_6] : memref<4x16x8xf32, #tpu.memory_space<vmem>>, vector<4x16x8xf32>
    tpu.vector_store %arg4[%c0_4, %c0_5, %c0_6], %3 {strides = array<i32>} : memref<4x16x8xf32, #tpu.memory_space<vmem>>, vector<4x16x8xf32>,
    %c0_7 = arith.constant 0 : index
    %c0_8 = arith.constant 0 : index
    %c0_9 = arith.constant 0 : index
    %5 = tpu.strided_load %arg4[%c0_7, %c0_8, %c0_9] {strides = array<i32: 1, 2, 1>} : memref<4x16x8xf32, #tpu.memory_space<vmem>>, vector<4x8x8xf32>
    %c0_10 = arith.constant 0 : index
    %c1_11 = arith.constant 1 : index
    %c0_12 = arith.constant 0 : index
    %6 = tpu.strided_load %arg4[%c0_10, %c1_11, %c0_12] {strides = array<i32: 1, 2, 1>} : memref<4x16x8xf32, #tpu.memory_space<vmem>>, vector<4x8x8xf32>
    %7 = arith.maximumf %5, %6 : vector<4x8x8xf32>
    %8 = tpu.transpose %7, [0, 2, 1] : vector<4x8x8xf32> -> vector<4x8x8xf32>
    %c0_13 = arith.constant 0 : index
    %c0_14 = arith.constant 0 : index
    %c0_15 = arith.constant 0 : index
    %9 = vector.load %arg2[%c0_13, %c0_14, %c0_15] : memref<4x8x8xf32, #tpu.memory_space<vmem>>, vector<4x8x8xf32>
    tpu.vector_store %arg2[%c0_13, %c0_14, %c0_15], %8 {strides = array<i32>} : memref<4x8x8xf32, #tpu.memory_space<vmem>>, vector<4x8x8xf32>,
    %c0_16 = arith.constant 0 : index
    %c0_17 = arith.constant 0 : index
    %c0_18 = arith.constant 0 : index
    %10 = tpu.strided_load %arg1[%c0_16, %c0_17, %c0_18] {strides = array<i32: 1, 4, 1>} : memref<4x16x16xf32, #tpu.memory_space<vmem>>, vector<4x4x16xf32>
    %c0_19 = arith.constant 0 : index
    %c1_20 = arith.constant 1 : index
    %c0_21 = arith.constant 0 : index
    %11 = tpu.strided_load %arg1[%c0_19, %c1_20, %c0_21] {strides = array<i32: 1, 4, 1>} : memref<4x16x16xf32, #tpu.memory_space<vmem>>, vector<4x4x16xf32>
    %12 = arith.maximumf %10, %11 : vector<4x4x16xf32>
    %c0_22 = arith.constant 0 : index
    %c2 = arith.constant 2 : index
    %c0_23 = arith.constant 0 : index
    %13 = tpu.strided_load %arg1[%c0_22, %c2, %c0_23] {strides = array<i32: 1, 4, 1>} : memref<4x16x16xf32, #tpu.memory_space<vmem>>, vector<4x4x16xf32>
    %14 = arith.maximumf %12, %13 : vector<4x4x16xf32>
    %c0_24 = arith.constant 0 : index
    %c3 = arith.constant 3 : index
    %c0_25 = arith.constant 0 : index
    %15 = tpu.strided_load %arg1[%c0_24, %c3, %c0_25] {strides = array<i32: 1, 4, 1>} : memref<4x16x16xf32, #tpu.memory_space<vmem>>, vector<4x4x16xf32>
    %16 = arith.maximumf %14, %15 : vector<4x4x16xf32>
    %17 = tpu.transpose %16, [0, 2, 1] : vector<4x4x16xf32> -> vector<4x16x4xf32>
    %c0_26 = arith.constant 0 : index
    %c0_27 = arith.constant 0 : index
    %c0_28 = arith.constant 0 : index
    %18 = vector.load %arg4[%c0_26, %c0_27, %c0_28] : memref<4x16x8xf32, #tpu.memory_space<vmem>>, vector<4x16x4xf32>
    tpu.vector_store %arg4[%c0_26, %c0_27, %c0_28], %17 {strides = array<i32>} : memref<4x16x8xf32, #tpu.memory_space<vmem>>, vector<4x16x4xf32>,
    %c0_29 = arith.constant 0 : index
    %c0_30 = arith.constant 0 : index
    %c0_31 = arith.constant 0 : index
    %19 = tpu.strided_load %arg4[%c0_29, %c0_30, %c0_31] {strides = array<i32: 1, 4, 1>} : memref<4x16x8xf32, #tpu.memory_space<vmem>>, vector<4x4x4xf32>
    %c0_32 = arith.constant 0 : index
    %c1_33 = arith.constant 1 : index
    %c0_34 = arith.constant 0 : index
    %20 = tpu.strided_load %arg4[%c0_32, %c1_33, %c0_34] {strides = array<i32: 1, 4, 1>} : memref<4x16x8xf32, #tpu.memory_space<vmem>>, vector<4x4x4xf32>
    %21 = arith.maximumf %19, %20 : vector<4x4x4xf32>
    %c0_35 = arith.constant 0 : index
    %c2_36 = arith.constant 2 : index
    %c0_37 = arith.constant 0 : index
    %22 = tpu.strided_load %arg4[%c0_35, %c2_36, %c0_37] {strides = array<i32: 1, 4, 1>} : memref<4x16x8xf32, #tpu.memory_space<vmem>>, vector<4x4x4xf32>
    %23 = arith.maximumf %21, %22 : vector<4x4x4xf32>
    %c0_38 = arith.constant 0 : index
    %c3_39 = arith.constant 3 : index
    %c0_40 = arith.constant 0 : index
    %24 = tpu.strided_load %arg4[%c0_38, %c3_39, %c0_40] {strides = array<i32: 1, 4, 1>} : memref<4x16x8xf32, #tpu.memory_space<vmem>>, vector<4x4x4xf32>
    %25 = arith.maximumf %23, %24 : vector<4x4x4xf32>
    %26 = tpu.transpose %25, [0, 2, 1] : vector<4x4x4xf32> -> vector<4x4x4xf32>
    %c0_41 = arith.constant 0 : index
    %c0_42 = arith.constant 0 : index
    %c0_43 = arith.constant 0 : index
    %27 = vector.load %arg3[%c0_41, %c0_42, %c0_43] : memref<4x4x4xf32, #tpu.memory_space<vmem>>, vector<4x4x4xf32>
    tpu.vector_store %arg3[%c0_41, %c0_42, %c0_43], %26 {strides = array<i32>} : memref<4x4x4xf32, #tpu.memory_space<vmem>>, vector<4x4x4xf32>,
    return
  }
  func.func @transform_0(%arg0: i32) -> (i32, i32, i32) {
    %c0_i32 = arith.constant 0 : i32
    %c0_i32_0 = arith.constant 0 : i32
    %c0_i32_1 = arith.constant 0 : i32
    return %arg0, %c0_i32, %c0_i32_0 : i32, i32, i32
  }
  func.func @transform_1(%arg0: i32) -> (i32, i32, i32) {
    %c0_i32 = arith.constant 0 : i32
    %c0_i32_0 = arith.constant 0 : i32
    %c0_i32_1 = arith.constant 0 : i32
    return %arg0, %c0_i32, %c0_i32_0 : i32, i32, i32
  }
  func.func @transform_2(%arg0: i32) -> (i32, i32, i32) {
    %c0_i32 = arith.constant 0 : i32
    %c0_i32_0 = arith.constant 0 : i32
    %c0_i32_1 = arith.constant 0 : i32
    return %arg0, %c0_i32, %c0_i32_0 : i32, i32, i32
  }
}

</mosaic_0001>

<llo_original>
// kernel: tpu_custom_call.1
$region0: #{tpu_custom_call.1}
  #allocation0 [shape = 'u32[]', space=smem, size = 0x4, offset = 0x4, fixed_abs, tag = 'smem constant byte address 0x4 - core index']
  #allocation1 [shape = 'u32[144,128]{1,0:T(1,128)}', space=vmem, size = 0x12000, scoped, tag = 'internal scratch']
  #allocation2 [shape = 'f32[4,16,8]{2,1,0:T(8,128)}', space=vmem, size = 0x8000, scoped, tag = 'scratch operand']
  %s0 = inlined_call_operand.hbm [shape: f32[8,16,16], index: 0, kind: input, shape index: {}]
  %s1 = inlined_call_operand.hbm [shape: f32[8,8,8], index: 1, kind: output, shape index: {0}]
  %s2 = inlined_call_operand.vmem [shape: f32[8,4,4], index: 2, kind: output, shape index: {1}]
  %3 = xla_tuple %s1, %s2
  %s4 = sld [smem:[#allocation0]]
  $region49: #{tpu_custom_call.1} parent=0
    _
  %s6 = ssub.s32 1, %s4
  %s7 = scalar_select 0, %s6, %s4
  $region1: #{tpu_custom_call.1} parent=0
    #allocation3 [shape = 'u8[65536]{0}', space=vmem, size = 0x10000, scoped, tag = 'input window, operand 0']
    #allocation4 [shape = 's32[2]{0}', space=sflag, size = 0x8, scoped, tag = 'scoped memory for tpu_custom_call.1']
    #allocation5 [shape = 's32[2]{0}', space=sflag, size = 0x8, scoped, tag = 'scoped memory for tpu_custom_call.1']
    #allocation6 [shape = 'u8[32768]{0}', space=vmem, size = 0x8000, scoped, tag = 'output window, operand 0']
    %8 = vsyncpa [#allocation4], 0
    %s9 = scalar_lea.sflag [#allocation4], 1
    %10 = vsyncpa %s9, 0
    %11 = vsyncpa [#allocation5], 0
    %s12 = scalar_lea.sflag [#allocation5], 1
    %13 = vsyncpa %s12, 0
    loop: start=0, step=1, limit=4
    $region2: #{tpu_custom_call.1} parent=1 // loop_pre_header
      _
    $region3: #{tpu_custom_call.1} parent=1 // loop_header
      %s15 = sphi 0, %s19
      %p16 = scmp.ge.s32.totalorder %s15, 4
      %s25 = sphi 0, %s27
      %s28 = sphi 0, %s25
      %s29 = sphi 0, %s28
      %s45 = sphi 0, %s29
      %s51 = sphi 0, %s53
      %s54 = sphi 0, %s51
      %s55 = sphi 0, %s54
      %s71 = sphi 0, %s55
      %s77 = sphi 0, %s79
      %s80 = sphi 0, %s77
      %s81 = sphi 0, %s80
      %s97 = sphi 0, %s81
    $region4: #{tpu_custom_call.1} parent=1 // loop_header_branch
      %18 = sbr.rel (%p16) target = $region8
    $region5: #{tpu_custom_call.1} parent=1 // loop_body
      %s20 = ssub.s32 %s15, 1
      %s21 = ssub.s32 %s15, 2
      %s22 = sadd.s32 %s15, 1
      %s23 = ssub.s32 %s15, %s22
      %p24 = scmp.eq.s32.totalorder %s23, 0
      %s26 = sadd.s32 %s25, 1
      %s27 = scalar_select %p24, %s25, %s26
      %p30 = pneg %p24
      %p31 = scmp.eq.s32.totalorder %s15, 1
      %p32 = por %p30, %p31
      %p33 = scmp.ne.s32.totalorder %s25, %s28
      %p34 = scmp.eq.s32.totalorder %s15, 0
      %p35 = por %p33, %p34
      %p36 = scmp.ne.s32.totalorder %s25, %s28
      %p37 = scmp.eq.s32.totalorder %s20, 1
      %p38 = por %p36, %p37
      %p39 = scmp.ne.s32.totalorder %s28, %s29
      %p40 = scmp.eq.s32.totalorder %s20, 0
      %p41 = por %p39, %p40
      %p42 = scmp.ne.s32.totalorder %s28, %s29
      %p43 = scmp.eq.s32.totalorder %s21, 1
      %p44 = por %p42, %p43
      %p46 = scmp.ne.s32.totalorder %s29, %s45
      %p47 = scmp.eq.s32.totalorder %s21, 0
      %p48 = por %p46, %p47
      %s49 = ssub.s32 %s15, %s22
      %p50 = scmp.eq.s32.totalorder %s49, 0
      %s52 = sadd.s32 %s51, 1
      %s53 = scalar_select %p50, %s51, %s52
      %p56 = pneg %p50
      %p57 = scmp.eq.s32.totalorder %s15, 1
      %p58 = por %p56, %p57
      %p59 = scmp.ne.s32.totalorder %s51, %s54
      %p60 = scmp.eq.s32.totalorder %s15, 0
      %p61 = por %p59, %p60
      %p62 = scmp.ne.s32.totalorder %s51, %s54
      %p63 = scmp.eq.s32.totalorder %s20, 1
      %p64 = por %p62, %p63
      %p65 = scmp.ne.s32.totalorder %s54, %s55
      %p66 = scmp.eq.s32.totalorder %s20, 0
      %p67 = por %p65, %p66
      %p68 = scmp.ne.s32.totalorder %s54, %s55
      %p69 = scmp.eq.s32.totalorder %s21, 1
      %p70 = por %p68, %p69
      %p72 = scmp.ne.s32.totalorder %s55, %s71
      %p73 = scmp.eq.s32.totalorder %s21, 0
      %p74 = por %p72, %p73
      %s75 = ssub.s32 %s15, %s22
      %p76 = scmp.eq.s32.totalorder %s75, 0
      %s78 = sadd.s32 %s77, 1
      %s79 = scalar_select %p76, %s77, %s78
      %p82 = pneg %p76
      %p83 = scmp.eq.s32.totalorder %s15, 1
      %p84 = por %p82, %p83
      %p85 = scmp.ne.s32.totalorder %s77, %s80
      %p86 = scmp.eq.s32.totalorder %s15, 0
      %p87 = por %p85, %p86
      %p88 = scmp.ne.s32.totalorder %s77, %s80
      %p89 = scmp.eq.s32.totalorder %s20, 1
      %p90 = por %p88, %p89
      %p91 = scmp.ne.s32.totalorder %s80, %s81
      %p92 = scmp.eq.s32.totalorder %s20, 0
      %p93 = por %p91, %p92
      %p94 = scmp.ne.s32.totalorder %s80, %s81
      %p95 = scmp.eq.s32.totalorder %s21, 1
      %p96 = por %p94, %p95
      %p98 = scmp.ne.s32.totalorder %s81, %s97
      %p99 = scmp.eq.s32.totalorder %s21, 0
      %p100 = por %p98, %p99
      %p101 = scmp.le.s32.totalorder 1, %s15
      %p102 = scmp.lt.s32.totalorder %s15, 3
      %p103 = pnand %p101, %p102
      %p104 = pneg %p103
      // Predicated region
      $region9: #{tpu_custom_call.1} parent=5 // pred_check
        _
      $region10: #{tpu_custom_call.1} parent=5 // pred_check_branch
        %106 = sbr.rel (%p103) target = $region12
      $region11: #{tpu_custom_call.1} parent=5 // pred_region
        %s107 = ssub.s32 %s15, 1
      $region12: #{tpu_custom_call.1} parent=5 // pred_fallthru
        _
      %p108 = scmp.lt.s32.totalorder %s15, 2
      // Predicated region
      $region13: #{tpu_custom_call.1} parent=5 // pred_check
        %p109 = pneg %p108
      $region14: #{tpu_custom_call.1} parent=5 // pred_check_branch
        %111 = sbr.rel (%p109) target = $region16
      $region15: #{tpu_custom_call.1} parent=5 // pred_region
        // Predicated region
        $region17: #{tpu_custom_call.1} parent=15 // pred_check
          %p112 = pneg %p35
        $region18: #{tpu_custom_call.1} parent=15 // pred_check_branch
          %114 = sbr.rel (%p112) target = $region20
        $region19: #{tpu_custom_call.1} parent=15 // pred_region
          %s115 = sand.u32 %s25, 1
          %s116 = scalar_lea.sflag [#allocation4], %s115
          %s117 = sand.u32 %s25, 1
          %s118 = smul.addr %s117, 64
          %s119 = scalar_lea.vmem [#allocation3], %s118
          %s120 = smul.u32 4, %s15
          %s122 = ssub.s32 1024, 1024
          %123 = vsyncadd %s116, %s122
          %s124 = smul.addr %s120, 2
          %s125 = smul.addr %s124, 128
          %s126 = scalar_lea.hbm %s0, %s125
          %s127 = sshll.u32 %s119, 4
          %s128 = int_to_ptr.vmem [resolvable:$true] %s127
          %133 = dma.hbm_to_vmem [thread:$0]  %s126, 1024, %s128, %s116, 128, 128, 8
        $region20: #{tpu_custom_call.1} parent=15 // pred_fallthru
          _
      $region16: #{tpu_custom_call.1} parent=5 // pred_fallthru
        _
      %p134 = scmp.le.s32.totalorder 1, %s15
      %p135 = scmp.lt.s32.totalorder %s15, 3
      %p136 = pnand %p134, %p135
      %p137 = pneg %p136
      // Predicated region
      $region21: #{tpu_custom_call.1} parent=5 // pred_check
        _
      $region22: #{tpu_custom_call.1} parent=5 // pred_check_branch
        %139 = sbr.rel (%p136) target = $region24
      $region23: #{tpu_custom_call.1} parent=5 // pred_region
        %s140 = ssub.s32 %s15, 1
        %s141 = sand.u32 %s28, 1
        %s142 = scalar_lea.sflag [#allocation4], %s141
        %s143 = sand.u32 %s28, 1
        %s144 = smul.addr %s143, 64
        %s145 = scalar_lea.vmem [#allocation3], %s144
        // Predicated region
        $region25: #{tpu_custom_call.1} parent=23 // pred_check
          %p146 = pneg %p41
        $region26: #{tpu_custom_call.1} parent=23 // pred_check_branch
          %148 = sbr.rel (%p146) target = $region28
        $region27: #{tpu_custom_call.1} parent=23 // pred_region
          %149 = dma.done %s142, 1024
        $region28: #{tpu_custom_call.1} parent=23 // pred_fallthru
          _
        %s150 = sand.u32 %s28, 1
        %s151 = scalar_lea.sflag [#allocation4], %s150
        %s152 = sand.u32 %s28, 1
        %s153 = smul.addr %s152, 64
        %s154 = scalar_lea.vmem [#allocation3], %s153
        %p155 = pneg %p41
        %p156 = pneg %p38
        %p157 = pneg %p67
        %p158 = pneg %p64
        %s159 = sand.u32 %s54, 1
        %s160 = scalar_lea.sflag [#allocation5], %s159
        %s161 = sand.u32 %s54, 1
        %s162 = smul.addr %s161, 32
        %s163 = scalar_lea.vmem [#allocation6], %s162
        %p164 = pneg %p93
        %p165 = pneg %p90
        %s166 = smul.u32 4, %s20
        %p167 = scmp.lt.s32.totalorder %s166, 7
        %s168 = scalar_select %p167, %s166, 7
        %s169 = smul.addr %s168, 4
        %s170 = scalar_lea.vmem %s2, %s169
        %s171 = smul.u32 4, %s20
        %s172 = smul.u32 4, %s20
        %s173 = smul.u32 4, %s20
        %p174 = scmp.lt.s32.totalorder %s173, 7
        %s175 = scalar_select %p174, %s173, 7
        %s176 = smul.addr %s175, 4
        %s177 = scalar_lea.vmem %s2, %s176
        %s178 = smul.u32 4, %s20
        %v179 = vld [vmem:[%s145] ss:$2 sm:$0xff]
        %s180 = scalar_lea.vmem %s145, 16 [#allocation3]
        %v181 = vld [vmem:[%s180] ss:$2 sm:$0xff]
        %s182 = scalar_lea.vmem %s145, 32 [#allocation3]
        %v183 = vld [vmem:[%s182] ss:$2 sm:$0xff]
        %s184 = scalar_lea.vmem %s145, 48 [#allocation3]
        %v185 = vld [vmem:[%s184] ss:$2 sm:$0xff]
        %s186 = scalar_lea.vmem %s145, 1 [#allocation3]
        %v187 = vld [vmem:[%s186] ss:$2 sm:$0xff]
        %s188 = scalar_lea.vmem %s145, 17 [#allocation3]
        %v189 = vld [vmem:[%s188] ss:$2 sm:$0xff]
        %s190 = scalar_lea.vmem %s145, 33 [#allocation3]
        %v191 = vld [vmem:[%s190] ss:$2 sm:$0xff]
        %s192 = scalar_lea.vmem %s145, 49 [#allocation3]
        %v193 = vld [vmem:[%s192] ss:$2 sm:$0xff]
        %v194 = vmax.f32 %v179, %v187
        %v195 = vmax.f32 %v181, %v189
        %v196 = vmax.f32 %v183, %v191
        %v197 = vmax.f32 %v185, %v193
        %198 = vxpose.xlu0.b32.start [1/16] %v194, 128
        %199 = vxpose.xlu0.b32.cont [2/16] 0.0, 128
        %200 = vxpose.xlu0.b32.cont [3/16] 0.0, 128
        %201 = vxpose.xlu0.b32.cont [4/16] 0.0, 128
        %202 = vxpose.xlu0.b32.cont [5/16] 0.0, 128
        %203 = vxpose.xlu0.b32.cont [6/16] 0.0, 128
        %204 = vxpose.xlu0.b32.cont [7/16] 0.0, 128
        %205 = vxpose.xlu0.b32.cont [8/16] 0.0, 128
        %206 = vxpose.xlu0.b32.cont [9/16] 0.0, 128
        %207 = vxpose.xlu0.b32.cont [10/16] 0.0, 128
        %208 = vxpose.xlu0.b32.cont [11/16] 0.0, 128
        %209 = vxpose.xlu0.b32.cont [12/16] 0.0, 128
        %210 = vxpose.xlu0.b32.cont [13/16] 0.0, 128
        %211 = vxpose.xlu0.b32.cont [14/16] 0.0, 128
        %212 = vxpose.xlu0.b32.cont [15/16] 0.0, 128
        %213 = vxpose.xlu0.b32.end [16/16] 0.0, 128
        %v214 = vpop.trf.xlu0
        %v215 = vpop.trf.xlu0
        %v216 = vpop.trf.xlu0
        %v217 = vpop.trf.xlu0
        %v218 = vpop.trf.xlu0
        %v219 = vpop.trf.xlu0
        %v220 = vpop.trf.xlu0
        %v221 = vpop.trf.xlu0
        %v222 = vpop.trf.xlu0
        %v223 = vpop.trf.xlu0
        %v224 = vpop.trf.xlu0
        %v225 = vpop.trf.xlu0
        %v226 = vpop.trf.xlu0
        %v227 = vpop.trf.xlu0
        %v228 = vpop.trf.xlu0
        %v229 = vpop.trf.xlu0
        %230 = vxpose.xlu0.b32.start [1/16] %v195, 128
        %231 = vxpose.xlu0.b32.cont [2/16] 0.0, 128
        %232 = vxpose.xlu0.b32.cont [3/16] 0.0, 128
        %233 = vxpose.xlu0.b32.cont [4/16] 0.0, 128
        %234 = vxpose.xlu0.b32.cont [5/16] 0.0, 128
        %235 = vxpose.xlu0.b32.cont [6/16] 0.0, 128
        %236 = vxpose.xlu0.b32.cont [7/16] 0.0, 128
        %237 = vxpose.xlu0.b32.cont [8/16] 0.0, 128
        %238 = vxpose.xlu0.b32.cont [9/16] 0.0, 128
        %239 = vxpose.xlu0.b32.cont [10/16] 0.0, 128
        %240 = vxpose.xlu0.b32.cont [11/16] 0.0, 128
        %241 = vxpose.xlu0.b32.cont [12/16] 0.0, 128
        %242 = vxpose.xlu0.b32.cont [13/16] 0.0, 128
        %243 = vxpose.xlu0.b32.cont [14/16] 0.0, 128
        %244 = vxpose.xlu0.b32.cont [15/16] 0.0, 128
        %245 = vxpose.xlu0.b32.end [16/16] 0.0, 128
        %v246 = vpop.trf.xlu0
        %v247 = vpop.trf.xlu0
        %v248 = vpop.trf.xlu0
        %v249 = vpop.trf.xlu0
        %v250 = vpop.trf.xlu0
        %v251 = vpop.trf.xlu0
        %v252 = vpop.trf.xlu0
        %v253 = vpop.trf.xlu0
        %v254 = vpop.trf.xlu0
        %v255 = vpop.trf.xlu0
        %v256 = vpop.trf.xlu0
        %v257 = vpop.trf.xlu0
        %v258 = vpop.trf.xlu0
        %v259 = vpop.trf.xlu0
        %v260 = vpop.trf.xlu0
        %v261 = vpop.trf.xlu0
        %262 = vxpose.xlu0.b32.start [1/16] %v196, 128
        %263 = vxpose.xlu0.b32.cont [2/16] 0.0, 128
        %264 = vxpose.xlu0.b32.cont [3/16] 0.0, 128
        %265 = vxpose.xlu0.b32.cont [4/16] 0.0, 128
        %266 = vxpose.xlu0.b32.cont [5/16] 0.0, 128
        %267 = vxpose.xlu0.b32.cont [6/16] 0.0, 128
        %268 = vxpose.xlu0.b32.cont [7/16] 0.0, 128
        %269 = vxpose.xlu0.b32.cont [8/16] 0.0, 128
        %270 = vxpose.xlu0.b32.cont [9/16] 0.0, 128
        %271 = vxpose.xlu0.b32.cont [10/16] 0.0, 128
        %272 = vxpose.xlu0.b32.cont [11/16] 0.0, 128
        %273 = vxpose.xlu0.b32.cont [12/16] 0.0, 128
        %274 = vxpose.xlu0.b32.cont [13/16] 0.0, 128
        %275 = vxpose.xlu0.b32.cont [14/16] 0.0, 128
        %276 = vxpose.xlu0.b32.cont [15/16] 0.0, 128
        %277 = vxpose.xlu0.b32.end [16/16] 0.0, 128
        %v278 = vpop.trf.xlu0
        %v279 = vpop.trf.xlu0
        %v280 = vpop.trf.xlu0
        %v281 = vpop.trf.xlu0
        %v282 = vpop.trf.xlu0
        %v283 = vpop.trf.xlu0
        %v284 = vpop.trf.xlu0
        %v285 = vpop.trf.xlu0
        %v286 = vpop.trf.xlu0
        %v287 = vpop.trf.xlu0
        %v288 = vpop.trf.xlu0
        %v289 = vpop.trf.xlu0
        %v290 = vpop.trf.xlu0
        %v291 = vpop.trf.xlu0
        %v292 = vpop.trf.xlu0
        %v293 = vpop.trf.xlu0
        %294 = vxpose.xlu0.b32.start [1/16] %v197, 128
        %295 = vxpose.xlu0.b32.cont [2/16] 0.0, 128
        %296 = vxpose.xlu0.b32.cont [3/16] 0.0, 128
        %297 = vxpose.xlu0.b32.cont [4/16] 0.0, 128
        %298 = vxpose.xlu0.b32.cont [5/16] 0.0, 128
        %299 = vxpose.xlu0.b32.cont [6/16] 0.0, 128
        %300 = vxpose.xlu0.b32.cont [7/16] 0.0, 128
        %301 = vxpose.xlu0.b32.cont [8/16] 0.0, 128
        %302 = vxpose.xlu0.b32.cont [9/16] 0.0, 128
        %303 = vxpose.xlu0.b32.cont [10/16] 0.0, 128
        %304 = vxpose.xlu0.b32.cont [11/16] 0.0, 128
        %305 = vxpose.xlu0.b32.cont [12/16] 0.0, 128
        %306 = vxpose.xlu0.b32.cont [13/16] 0.0, 128
        %307 = vxpose.xlu0.b32.cont [14/16] 0.0, 128
        %308 = vxpose.xlu0.b32.cont [15/16] 0.0, 128
        %309 = vxpose.xlu0.b32.end [16/16] 0.0, 128
        %v310 = vpop.trf.xlu0
        %v311 = vpop.trf.xlu0
        %v312 = vpop.trf.xlu0
        %v313 = vpop.trf.xlu0
        %v314 = vpop.trf.xlu0
        %v315 = vpop.trf.xlu0
        %v316 = vpop.trf.xlu0
        %v317 = vpop.trf.xlu0
        %v318 = vpop.trf.xlu0
        %v319 = vpop.trf.xlu0
        %v320 = vpop.trf.xlu0
        %v321 = vpop.trf.xlu0
        %v322 = vpop.trf.xlu0
        %v323 = vpop.trf.xlu0
        %v324 = vpop.trf.xlu0
        %v325 = vpop.trf.xlu0
        %vm326 = vcmask 64512
        %327 = vst.msk [vmem:[#allocation2] sm:$0xff] %vm326, %v214
        %328 = vst.msk [vmem:[#allocation2 + $0x8] sm:$0xff] %vm326, %v215
        %329 = vst.msk [vmem:[#allocation2 + $0x10] sm:$0xff] %vm326, %v246
        %330 = vst.msk [vmem:[#allocation2 + $0x18] sm:$0xff] %vm326, %v247
        %331 = vst.msk [vmem:[#allocation2 + $0x20] sm:$0xff] %vm326, %v278
        %332 = vst.msk [vmem:[#allocation2 + $0x28] sm:$0xff] %vm326, %v279
        %333 = vst.msk [vmem:[#allocation2 + $0x30] sm:$0xff] %vm326, %v310
        %334 = vst.msk [vmem:[#allocation2 + $0x38] sm:$0xff] %vm326, %v311
        %v335 = vld [vmem:[#allocation2] ss:$2 sm:$0xff]
        %s336 = scalar_lea.vmem [#allocation2], 16
        %v337 = vld [vmem:[%s336] ss:$2 sm:$0xff]
        %s338 = scalar_lea.vmem [#allocation2], 32
        %v339 = vld [vmem:[%s338] ss:$2 sm:$0xff]
        %s340 = scalar_lea.vmem [#allocation2], 48
        %v341 = vld [vmem:[%s340] ss:$2 sm:$0xff]
        %s342 = scalar_lea.vmem [#allocation2], 1
        %v343 = vld [vmem:[%s342] ss:$2 sm:$0xff]
        %s344 = scalar_lea.vmem [#allocation2], 17
        %v345 = vld [vmem:[%s344] ss:$2 sm:$0xff]
        %s346 = scalar_lea.vmem [#allocation2], 33
        %v347 = vld [vmem:[%s346] ss:$2 sm:$0xff]
        %s348 = scalar_lea.vmem [#allocation2], 49
        %v349 = vld [vmem:[%s348] ss:$2 sm:$0xff]
        %v350 = vmax.f32 %v335, %v343
        %v351 = vmax.f32 %v337, %v345
        %v352 = vmax.f32 %v339, %v347
        %v353 = vmax.f32 %v341, %v349
        %354 = vxpose.xlu0.b32.start [1/16] %v350, 128
        %355 = vxpose.xlu0.b32.cont [2/16] 0.0, 128
        %356 = vxpose.xlu0.b32.cont [3/16] 0.0, 128
        %357 = vxpose.xlu0.b32.cont [4/16] 0.0, 128
        %358 = vxpose.xlu0.b32.cont [5/16] 0.0, 128
        %359 = vxpose.xlu0.b32.cont [6/16] 0.0, 128
        %360 = vxpose.xlu0.b32.cont [7/16] 0.0, 128
        %361 = vxpose.xlu0.b32.cont [8/16] 0.0, 128
        %362 = vxpose.xlu0.b32.cont [9/16] 0.0, 128
        %363 = vxpose.xlu0.b32.cont [10/16] 0.0, 128
        %364 = vxpose.xlu0.b32.cont [11/16] 0.0, 128
        %365 = vxpose.xlu0.b32.cont [12/16] 0.0, 128
        %366 = vxpose.xlu0.b32.cont [13/16] 0.0, 128
        %367 = vxpose.xlu0.b32.cont [14/16] 0.0, 128
        %368 = vxpose.xlu0.b32.cont [15/16] 0.0, 128
        %369 = vxpose.xlu0.b32.end [16/16] 0.0, 128
        %v370 = vpop.trf.xlu0
        %v371 = vpop.trf.xlu0
        %v372 = vpop.trf.xlu0
        %v373 = vpop.trf.xlu0
        %v374 = vpop.trf.xlu0
        %v375 = vpop.trf.xlu0
        %v376 = vpop.trf.xlu0
        %v377 = vpop.trf.xlu0
        %v378 = vpop.trf.xlu0
        %v379 = vpop.trf.xlu0
        %v380 = vpop.trf.xlu0
        %v381 = vpop.trf.xlu0
        %v382 = vpop.trf.xlu0
        %v383 = vpop.trf.xlu0
        %v384 = vpop.trf.xlu0
        %v385 = vpop.trf.xlu0
        %386 = vxpose.xlu0.b32.start [1/16] %v351, 128
        %387 = vxpose.xlu0.b32.cont [2/16] 0.0, 128
        %388 = vxpose.xlu0.b32.cont [3/16] 0.0, 128
        %389 = vxpose.xlu0.b32.cont [4/16] 0.0, 128
        %390 = vxpose.xlu0.b32.cont [5/16] 0.0, 128
        %391 = vxpose.xlu0.b32.cont [6/16] 0.0, 128
        %392 = vxpose.xlu0.b32.cont [7/16] 0.0, 128
        %393 = vxpose.xlu0.b32.cont [8/16] 0.0, 128
        %394 = vxpose.xlu0.b32.cont [9/16] 0.0, 128
        %395 = vxpose.xlu0.b32.cont [10/16] 0.0, 128
        %396 = vxpose.xlu0.b32.cont [11/16] 0.0, 128
        %397 = vxpose.xlu0.b32.cont [12/16] 0.0, 128
        %398 = vxpose.xlu0.b32.cont [13/16] 0.0, 128
        %399 = vxpose.xlu0.b32.cont [14/16] 0.0, 128
        %400 = vxpose.xlu0.b32.cont [15/16] 0.0, 128
        %401 = vxpose.xlu0.b32.end [16/16] 0.0, 128
        %v402 = vpop.trf.xlu0
        %v403 = vpop.trf.xlu0
        %v404 = vpop.trf.xlu0
        %v405 = vpop.trf.xlu0
        %v406 = vpop.trf.xlu0
        %v407 = vpop.trf.xlu0
        %v408 = vpop.trf.xlu0
        %v409 = vpop.trf.xlu0
        %v410 = vpop.trf.xlu0
        %v411 = vpop.trf.xlu0
        %v412 = vpop.trf.xlu0
        %v413 = vpop.trf.xlu0
        %v414 = vpop.trf.xlu0
        %v415 = vpop.trf.xlu0
        %v416 = vpop.trf.xlu0
        %v417 = vpop.trf.xlu0
        %418 = vxpose.xlu0.b32.start [1/16] %v352, 128
        %419 = vxpose.xlu0.b32.cont [2/16] 0.0, 128
        %420 = vxpose.xlu0.b32.cont [3/16] 0.0, 128
        %421 = vxpose.xlu0.b32.cont [4/16] 0.0, 128
        %422 = vxpose.xlu0.b32.cont [5/16] 0.0, 128
        %423 = vxpose.xlu0.b32.cont [6/16] 0.0, 128
        %424 = vxpose.xlu0.b32.cont [7/16] 0.0, 128
        %425 = vxpose.xlu0.b32.cont [8/16] 0.0, 128
        %426 = vxpose.xlu0.b32.cont [9/16] 0.0, 128
        %427 = vxpose.xlu0.b32.cont [10/16] 0.0, 128
        %428 = vxpose.xlu0.b32.cont [11/16] 0.0, 128
        %429 = vxpose.xlu0.b32.cont [12/16] 0.0, 128
        %430 = vxpose.xlu0.b32.cont [13/16] 0.0, 128
        %431 = vxpose.xlu0.b32.cont [14/16] 0.0, 128
        %432 = vxpose.xlu0.b32.cont [15/16] 0.0, 128
        %433 = vxpose.xlu0.b32.end [16/16] 0.0, 128
        %v434 = vpop.trf.xlu0
        %v435 = vpop.trf.xlu0
        %v436 = vpop.trf.xlu0
        %v437 = vpop.trf.xlu0
        %v438 = vpop.trf.xlu0
        %v439 = vpop.trf.xlu0
        %v440 = vpop.trf.xlu0
        %v441 = vpop.trf.xlu0
        %v442 = vpop.trf.xlu0
        %v443 = vpop.trf.xlu0
        %v444 = vpop.trf.xlu0
        %v445 = vpop.trf.xlu0
        %v446 = vpop.trf.xlu0
        %v447 = vpop.trf.xlu0
        %v448 = vpop.trf.xlu0
        %v449 = vpop.trf.xlu0
        %450 = vxpose.xlu0.b32.start [1/16] %v353, 128
        %451 = vxpose.xlu0.b32.cont [2/16] 0.0, 128
        %452 = vxpose.xlu0.b32.cont [3/16] 0.0, 128
        %453 = vxpose.xlu0.b32.cont [4/16] 0.0, 128
        %454 = vxpose.xlu0.b32.cont [5/16] 0.0, 128
        %455 = vxpose.xlu0.b32.cont [6/16] 0.0, 128
        %456 = vxpose.xlu0.b32.cont [7/16] 0.0, 128
        %457 = vxpose.xlu0.b32.cont [8/16] 0.0, 128
        %458 = vxpose.xlu0.b32.cont [9/16] 0.0, 128
        %459 = vxpose.xlu0.b32.cont [10/16] 0.0, 128
        %460 = vxpose.xlu0.b32.cont [11/16] 0.0, 128
        %461 = vxpose.xlu0.b32.cont [12/16] 0.0, 128
        %462 = vxpose.xlu0.b32.cont [13/16] 0.0, 128
        %463 = vxpose.xlu0.b32.cont [14/16] 0.0, 128
        %464 = vxpose.xlu0.b32.cont [15/16] 0.0, 128
        %465 = vxpose.xlu0.b32.end [16/16] 0.0, 128
        %v466 = vpop.trf.xlu0
        %v467 = vpop.trf.xlu0
        %v468 = vpop.trf.xlu0
        %v469 = vpop.trf.xlu0
        %v470 = vpop.trf.xlu0
        %v471 = vpop.trf.xlu0
        %v472 = vpop.trf.xlu0
        %v473 = vpop.trf.xlu0
        %v474 = vpop.trf.xlu0
        %v475 = vpop.trf.xlu0
        %v476 = vpop.trf.xlu0
        %v477 = vpop.trf.xlu0
        %v478 = vpop.trf.xlu0
        %v479 = vpop.trf.xlu0
        %v480 = vpop.trf.xlu0
        %v481 = vpop.trf.xlu0
        %482 = vst.msk [vmem:[%s163] sm:$0xff] %vm326, %v370
        %483 = vst.msk [vmem:[%s163 + $0x8] sm:$0xff] %vm326, %v402
        %484 = vst.msk [vmem:[%s163 + $0x10] sm:$0xff] %vm326, %v434
        %485 = vst.msk [vmem:[%s163 + $0x18] sm:$0xff] %vm326, %v466
        %v486 = vld [vmem:[%s145] ss:$4 sm:$0xf]
        %v487 = vld [vmem:[%s180] ss:$4 sm:$0xf]
        %v488 = vld [vmem:[%s182] ss:$4 sm:$0xf]
        %v489 = vld [vmem:[%s184] ss:$4 sm:$0xf]
        %v490 = vld [vmem:[%s186] ss:$4 sm:$0xf]
        %v491 = vld [vmem:[%s188] ss:$4 sm:$0xf]
        %v492 = vld [vmem:[%s190] ss:$4 sm:$0xf]
        %v493 = vld [vmem:[%s192] ss:$4 sm:$0xf]
        %v494 = vmax.f32 %v486, %v490
        %v495 = vmax.f32 %v487, %v491
        %v496 = vmax.f32 %v488, %v492
        %v497 = vmax.f32 %v489, %v493
        %s498 = scalar_lea.vmem %s145, 2 [#allocation3]
        %v499 = vld [vmem:[%s498] ss:$4 sm:$0xf]
        %s500 = scalar_lea.vmem %s145, 18 [#allocation3]
        %v501 = vld [vmem:[%s500] ss:$4 sm:$0xf]
        %s502 = scalar_lea.vmem %s145, 34 [#allocation3]
        %v503 = vld [vmem:[%s502] ss:$4 sm:$0xf]
        %s504 = scalar_lea.vmem %s145, 50 [#allocation3]
        %v505 = vld [vmem:[%s504] ss:$4 sm:$0xf]
        %v506 = vmax.f32 %v494, %v499
        %v507 = vmax.f32 %v495, %v501
        %v508 = vmax.f32 %v496, %v503
        %v509 = vmax.f32 %v497, %v505
        %s510 = scalar_lea.vmem %s145, 3 [#allocation3]
        %v511 = vld [vmem:[%s510] ss:$4 sm:$0xf]
        %s512 = scalar_lea.vmem %s145, 19 [#allocation3]
        %v513 = vld [vmem:[%s512] ss:$4 sm:$0xf]
        %s514 = scalar_lea.vmem %s145, 35 [#allocation3]
        %v515 = vld [vmem:[%s514] ss:$4 sm:$0xf]
        %s516 = scalar_lea.vmem %s145, 51 [#allocation3]
        %v517 = vld [vmem:[%s516] ss:$4 sm:$0xf]
        %v518 = vmax.f32 %v506, %v511
        %v519 = vmax.f32 %v507, %v513
        %v520 = vmax.f32 %v508, %v515
        %v521 = vmax.f32 %v509, %v517
        %522 = vxpose.xlu0.b32.start [1/16] %v518, 128
        %523 = vxpose.xlu0.b32.cont [2/16] 0.0, 128
        %524 = vxpose.xlu0.b32.cont [3/16] 0.0, 128
        %525 = vxpose.xlu0.b32.cont [4/16] 0.0, 128
        %526 = vxpose.xlu0.b32.cont [5/16] 0.0, 128
        %527 = vxpose.xlu0.b32.cont [6/16] 0.0, 128
        %528 = vxpose.xlu0.b32.cont [7/16] 0.0, 128
        %529 = vxpose.xlu0.b32.cont [8/16] 0.0, 128
        %530 = vxpose.xlu0.b32.cont [9/16] 0.0, 128
        %531 = vxpose.xlu0.b32.cont [10/16] 0.0, 128
        %532 = vxpose.xlu0.b32.cont [11/16] 0.0, 128
        %533 = vxpose.xlu0.b32.cont [12/16] 0.0, 128
        %534 = vxpose.xlu0.b32.cont [13/16] 0.0, 128
        %535 = vxpose.xlu0.b32.cont [14/16] 0.0, 128
        %536 = vxpose.xlu0.b32.cont [15/16] 0.0, 128
        %537 = vxpose.xlu0.b32.end [16/16] 0.0, 128
        %v538 = vpop.trf.xlu0
        %v539 = vpop.trf.xlu0
        %v540 = vpop.trf.xlu0
        %v541 = vpop.trf.xlu0
        %v542 = vpop.trf.xlu0
        %v543 = vpop.trf.xlu0
        %v544 = vpop.trf.xlu0
        %v545 = vpop.trf.xlu0
        %v546 = vpop.trf.xlu0
        %v547 = vpop.trf.xlu0
        %v548 = vpop.trf.xlu0
        %v549 = vpop.trf.xlu0
        %v550 = vpop.trf.xlu0
        %v551 = vpop.trf.xlu0
        %v552 = vpop.trf.xlu0
        %v553 = vpop.trf.xlu0
        %554 = vxpose.xlu0.b32.start [1/16] %v519, 128
        %555 = vxpose.xlu0.b32.cont [2/16] 0.0, 128
        %556 = vxpose.xlu0.b32.cont [3/16] 0.0, 128
        %557 = vxpose.xlu0.b32.cont [4/16] 0.0, 128
        %558 = vxpose.xlu0.b32.cont [5/16] 0.0, 128
        %559 = vxpose.xlu0.b32.cont [6/16] 0.0, 128
        %560 = vxpose.xlu0.b32.cont [7/16] 0.0, 128
        %561 = vxpose.xlu0.b32.cont [8/16] 0.0, 128
        %562 = vxpose.xlu0.b32.cont [9/16] 0.0, 128
        %563 = vxpose.xlu0.b32.cont [10/16] 0.0, 128
        %564 = vxpose.xlu0.b32.cont [11/16] 0.0, 128
        %565 = vxpose.xlu0.b32.cont [12/16] 0.0, 128
        %566 = vxpose.xlu0.b32.cont [13/16] 0.0, 128
        %567 = vxpose.xlu0.b32.cont [14/16] 0.0, 128
        %568 = vxpose.xlu0.b32.cont [15/16] 0.0, 128
        %569 = vxpose.xlu0.b32.end [16/16] 0.0, 128
        %v570 = vpop.trf.xlu0
        %v571 = vpop.trf.xlu0
        %v572 = vpop.trf.xlu0
        %v573 = vpop.trf.xlu0
        %v574 = vpop.trf.xlu0
        %v575 = vpop.trf.xlu0
        %v576 = vpop.trf.xlu0
        %v577 = vpop.trf.xlu0
        %v578 = vpop.trf.xlu0
        %v579 = vpop.trf.xlu0
        %v580 = vpop.trf.xlu0
        %v581 = vpop.trf.xlu0
        %v582 = vpop.trf.xlu0
        %v583 = vpop.trf.xlu0
        %v584 = vpop.trf.xlu0
        %v585 = vpop.trf.xlu0
        %586 = vxpose.xlu0.b32.start [1/16] %v520, 128
        %587 = vxpose.xlu0.b32.cont [2/16] 0.0, 128
        %588 = vxpose.xlu0.b32.cont [3/16] 0.0, 128
        %589 = vxpose.xlu0.b32.cont [4/16] 0.0, 128
        %590 = vxpose.xlu0.b32.cont [5/16] 0.0, 128
        %591 = vxpose.xlu0.b32.cont [6/16] 0.0, 128
        %592 = vxpose.xlu0.b32.cont [7/16] 0.0, 128
        %593 = vxpose.xlu0.b32.cont [8/16] 0.0, 128
        %594 = vxpose.xlu0.b32.cont [9/16] 0.0, 128
        %595 = vxpose.xlu0.b32.cont [10/16] 0.0, 128
        %596 = vxpose.xlu0.b32.cont [11/16] 0.0, 128
        %597 = vxpose.xlu0.b32.cont [12/16] 0.0, 128
        %598 = vxpose.xlu0.b32.cont [13/16] 0.0, 128
        %599 = vxpose.xlu0.b32.cont [14/16] 0.0, 128
        %600 = vxpose.xlu0.b32.cont [15/16] 0.0, 128
        %601 = vxpose.xlu0.b32.end [16/16] 0.0, 128
        %v602 = vpop.trf.xlu0
        %v603 = vpop.trf.xlu0
        %v604 = vpop.trf.xlu0
        %v605 = vpop.trf.xlu0
        %v606 = vpop.trf.xlu0
        %v607 = vpop.trf.xlu0
        %v608 = vpop.trf.xlu0
        %v609 = vpop.trf.xlu0
        %v610 = vpop.trf.xlu0
        %v611 = vpop.trf.xlu0
        %v612 = vpop.trf.xlu0
        %v613 = vpop.trf.xlu0
        %v614 = vpop.trf.xlu0
        %v615 = vpop.trf.xlu0
        %v616 = vpop.trf.xlu0
        %v617 = vpop.trf.xlu0
        %618 = vxpose.xlu0.b32.start [1/16] %v521, 128
        %619 = vxpose.xlu0.b32.cont [2/16] 0.0, 128
        %620 = vxpose.xlu0.b32.cont [3/16] 0.0, 128
        %621 = vxpose.xlu0.b32.cont [4/16] 0.0, 128
        %622 = vxpose.xlu0.b32.cont [5/16] 0.0, 128
        %623 = vxpose.xlu0.b32.cont [6/16] 0.0, 128
        %624 = vxpose.xlu0.b32.cont [7/16] 0.0, 128
        %625 = vxpose.xlu0.b32.cont [8/16] 0.0, 128
        %626 = vxpose.xlu0.b32.cont [9/16] 0.0, 128
        %627 = vxpose.xlu0.b32.cont [10/16] 0.0, 128
        %628 = vxpose.xlu0.b32.cont [11/16] 0.0, 128
        %629 = vxpose.xlu0.b32.cont [12/16] 0.0, 128
        %630 = vxpose.xlu0.b32.cont [13/16] 0.0, 128
        %631 = vxpose.xlu0.b32.cont [14/16] 0.0, 128
        %632 = vxpose.xlu0.b32.cont [15/16] 0.0, 128
        %633 = vxpose.xlu0.b32.end [16/16] 0.0, 128
        %v634 = vpop.trf.xlu0
        %v635 = vpop.trf.xlu0
        %v636 = vpop.trf.xlu0
        %v637 = vpop.trf.xlu0
        %v638 = vpop.trf.xlu0
        %v639 = vpop.trf.xlu0
        %v640 = vpop.trf.xlu0
        %v641 = vpop.trf.xlu0
        %v642 = vpop.trf.xlu0
        %v643 = vpop.trf.xlu0
        %v644 = vpop.trf.xlu0
        %v645 = vpop.trf.xlu0
        %v646 = vpop.trf.xlu0
        %v647 = vpop.trf.xlu0
        %v648 = vpop.trf.xlu0
        %v649 = vpop.trf.xlu0
        %vm650 = vcmask 31744
        %651 = vst.msk [vmem:[#allocation2] sm:$0xff] %vm650, %v538
        %652 = vst.msk [vmem:[#allocation2 + $0x8] sm:$0xff] %vm650, %v539
        %653 = vst.msk [vmem:[#allocation2 + $0x10] sm:$0xff] %vm650, %v570
        %654 = vst.msk [vmem:[#allocation2 + $0x18] sm:$0xff] %vm650, %v571
        %655 = vst.msk [vmem:[#allocation2 + $0x20] sm:$0xff] %vm650, %v602
        %656 = vst.msk [vmem:[#allocation2 + $0x28] sm:$0xff] %vm650, %v603
        %657 = vst.msk [vmem:[#allocation2 + $0x30] sm:$0xff] %vm650, %v634
        %658 = vst.msk [vmem:[#allocation2 + $0x38] sm:$0xff] %vm650, %v635
        %v659 = vld [vmem:[#allocation2] ss:$4 sm:$0xf]
        %v660 = vld [vmem:[%s336] ss:$4 sm:$0xf]
        %v661 = vld [vmem:[%s338] ss:$4 sm:$0xf]
        %v662 = vld [vmem:[%s340] ss:$4 sm:$0xf]
        %v663 = vld [vmem:[%s342] ss:$4 sm:$0xf]
        %v664 = vld [vmem:[%s344] ss:$4 sm:$0xf]
        %v665 = vld [vmem:[%s346] ss:$4 sm:$0xf]
        %v666 = vld [vmem:[%s348] ss:$4 sm:$0xf]
        %v667 = vmax.f32 %v659, %v663
        %v668 = vmax.f32 %v660, %v664
        %v669 = vmax.f32 %v661, %v665
        %v670 = vmax.f32 %v662, %v666
        %s671 = scalar_lea.vmem [#allocation2], 2
        %v672 = vld [vmem:[%s671] ss:$4 sm:$0xf]
        %s673 = scalar_lea.vmem [#allocation2], 18
        %v674 = vld [vmem:[%s673] ss:$4 sm:$0xf]
        %s675 = scalar_lea.vmem [#allocation2], 34
        %v676 = vld [vmem:[%s675] ss:$4 sm:$0xf]
        %s677 = scalar_lea.vmem [#allocation2], 50
        %v678 = vld [vmem:[%s677] ss:$4 sm:$0xf]
        %v679 = vmax.f32 %v667, %v672
        %v680 = vmax.f32 %v668, %v674
        %v681 = vmax.f32 %v669, %v676
        %v682 = vmax.f32 %v670, %v678
        %s683 = scalar_lea.vmem [#allocation2], 3
        %v684 = vld [vmem:[%s683] ss:$4 sm:$0xf]
        %s685 = scalar_lea.vmem [#allocation2], 19
        %v686 = vld [vmem:[%s685] ss:$4 sm:$0xf]
        %s687 = scalar_lea.vmem [#allocation2], 35
        %v688 = vld [vmem:[%s687] ss:$4 sm:$0xf]
        %s689 = scalar_lea.vmem [#allocation2], 51
        %v690 = vld [vmem:[%s689] ss:$4 sm:$0xf]
        %v691 = vmax.f32 %v679, %v684
        %v692 = vmax.f32 %v680, %v686
        %v693 = vmax.f32 %v681, %v688
        %v694 = vmax.f32 %v682, %v690
        %695 = vxpose.xlu0.b32.start [1/16] %v691, 128
        %696 = vxpose.xlu0.b32.cont [2/16] 0.0, 128
        %697 = vxpose.xlu0.b32.cont [3/16] 0.0, 128
        %698 = vxpose.xlu0.b32.cont [4/16] 0.0, 128
        %699 = vxpose.xlu0.b32.cont [5/16] 0.0, 128
        %700 = vxpose.xlu0.b32.cont [6/16] 0.0, 128
        %701 = vxpose.xlu0.b32.cont [7/16] 0.0, 128
        %702 = vxpose.xlu0.b32.cont [8/16] 0.0, 128
        %703 = vxpose.xlu0.b32.cont [9/16] 0.0, 128
        %704 = vxpose.xlu0.b32.cont [10/16] 0.0, 128
        %705 = vxpose.xlu0.b32.cont [11/16] 0.0, 128
        %706 = vxpose.xlu0.b32.cont [12/16] 0.0, 128
        %707 = vxpose.xlu0.b32.cont [13/16] 0.0, 128
        %708 = vxpose.xlu0.b32.cont [14/16] 0.0, 128
        %709 = vxpose.xlu0.b32.cont [15/16] 0.0, 128
        %710 = vxpose.xlu0.b32.end [16/16] 0.0, 128
        %v711 = vpop.trf.xlu0
        %v712 = vpop.trf.xlu0
        %v713 = vpop.trf.xlu0
        %v714 = vpop.trf.xlu0
        %v715 = vpop.trf.xlu0
        %v716 = vpop.trf.xlu0
        %v717 = vpop.trf.xlu0
        %v718 = vpop.trf.xlu0
        %v719 = vpop.trf.xlu0
        %v720 = vpop.trf.xlu0
        %v721 = vpop.trf.xlu0
        %v722 = vpop.trf.xlu0
        %v723 = vpop.trf.xlu0
        %v724 = vpop.trf.xlu0
        %v725 = vpop.trf.xlu0
        %v726 = vpop.trf.xlu0
        %727 = vxpose.xlu0.b32.start [1/16] %v692, 128
        %728 = vxpose.xlu0.b32.cont [2/16] 0.0, 128
        %729 = vxpose.xlu0.b32.cont [3/16] 0.0, 128
        %730 = vxpose.xlu0.b32.cont [4/16] 0.0, 128
        %731 = vxpose.xlu0.b32.cont [5/16] 0.0, 128
        %732 = vxpose.xlu0.b32.cont [6/16] 0.0, 128
        %733 = vxpose.xlu0.b32.cont [7/16] 0.0, 128
        %734 = vxpose.xlu0.b32.cont [8/16] 0.0, 128
        %735 = vxpose.xlu0.b32.cont [9/16] 0.0, 128
        %736 = vxpose.xlu0.b32.cont [10/16] 0.0, 128
        %737 = vxpose.xlu0.b32.cont [11/16] 0.0, 128
        %738 = vxpose.xlu0.b32.cont [12/16] 0.0, 128
        %739 = vxpose.xlu0.b32.cont [13/16] 0.0, 128
        %740 = vxpose.xlu0.b32.cont [14/16] 0.0, 128
        %741 = vxpose.xlu0.b32.cont [15/16] 0.0, 128
        %742 = vxpose.xlu0.b32.end [16/16] 0.0, 128
        %v743 = vpop.trf.xlu0
        %v744 = vpop.trf.xlu0
        %v745 = vpop.trf.xlu0
        %v746 = vpop.trf.xlu0
        %v747 = vpop.trf.xlu0
        %v748 = vpop.trf.xlu0
        %v749 = vpop.trf.xlu0
        %v750 = vpop.trf.xlu0
        %v751 = vpop.trf.xlu0
        %v752 = vpop.trf.xlu0
        %v753 = vpop.trf.xlu0
        %v754 = vpop.trf.xlu0
        %v755 = vpop.trf.xlu0
        %v756 = vpop.trf.xlu0
        %v757 = vpop.trf.xlu0
        %v758 = vpop.trf.xlu0
        %759 = vxpose.xlu0.b32.start [1/16] %v693, 128
        %760 = vxpose.xlu0.b32.cont [2/16] 0.0, 128
        %761 = vxpose.xlu0.b32.cont [3/16] 0.0, 128
        %762 = vxpose.xlu0.b32.cont [4/16] 0.0, 128
        %763 = vxpose.xlu0.b32.cont [5/16] 0.0, 128
        %764 = vxpose.xlu0.b32.cont [6/16] 0.0, 128
        %765 = vxpose.xlu0.b32.cont [7/16] 0.0, 128
        %766 = vxpose.xlu0.b32.cont [8/16] 0.0, 128
        %767 = vxpose.xlu0.b32.cont [9/16] 0.0, 128
        %768 = vxpose.xlu0.b32.cont [10/16] 0.0, 128
        %769 = vxpose.xlu0.b32.cont [11/16] 0.0, 128
        %770 = vxpose.xlu0.b32.cont [12/16] 0.0, 128
        %771 = vxpose.xlu0.b32.cont [13/16] 0.0, 128
        %772 = vxpose.xlu0.b32.cont [14/16] 0.0, 128
        %773 = vxpose.xlu0.b32.cont [15/16] 0.0, 128
        %774 = vxpose.xlu0.b32.end [16/16] 0.0, 128
        %v775 = vpop.trf.xlu0
        %v776 = vpop.trf.xlu0
        %v777 = vpop.trf.xlu0
        %v778 = vpop.trf.xlu0
        %v779 = vpop.trf.xlu0
        %v780 = vpop.trf.xlu0
        %v781 = vpop.trf.xlu0
        %v782 = vpop.trf.xlu0
        %v783 = vpop.trf.xlu0
        %v784 = vpop.trf.xlu0
        %v785 = vpop.trf.xlu0
        %v786 = vpop.trf.xlu0
        %v787 = vpop.trf.xlu0
        %v788 = vpop.trf.xlu0
        %v789 = vpop.trf.xlu0
        %v790 = vpop.trf.xlu0
        %791 = vxpose.xlu0.b32.start [1/16] %v694, 128
        %792 = vxpose.xlu0.b32.cont [2/16] 0.0, 128
        %793 = vxpose.xlu0.b32.cont [3/16] 0.0, 128
        %794 = vxpose.xlu0.b32.cont [4/16] 0.0, 128
        %795 = vxpose.xlu0.b32.cont [5/16] 0.0, 128
        %796 = vxpose.xlu0.b32.cont [6/16] 0.0, 128
        %797 = vxpose.xlu0.b32.cont [7/16] 0.0, 128
        %798 = vxpose.xlu0.b32.cont [8/16] 0.0, 128
        %799 = vxpose.xlu0.b32.cont [9/16] 0.0, 128
        %800 = vxpose.xlu0.b32.cont [10/16] 0.0, 128
        %801 = vxpose.xlu0.b32.cont [11/16] 0.0, 128
        %802 = vxpose.xlu0.b32.cont [12/16] 0.0, 128
        %803 = vxpose.xlu0.b32.cont [13/16] 0.0, 128
        %804 = vxpose.xlu0.b32.cont [14/16] 0.0, 128
        %805 = vxpose.xlu0.b32.cont [15/16] 0.0, 128
        %806 = vxpose.xlu0.b32.end [16/16] 0.0, 128
        %v807 = vpop.trf.xlu0
        %v808 = vpop.trf.xlu0
        %v809 = vpop.trf.xlu0
        %v810 = vpop.trf.xlu0
        %v811 = vpop.trf.xlu0
        %v812 = vpop.trf.xlu0
        %v813 = vpop.trf.xlu0
        %v814 = vpop.trf.xlu0
        %v815 = vpop.trf.xlu0
        %v816 = vpop.trf.xlu0
        %v817 = vpop.trf.xlu0
        %v818 = vpop.trf.xlu0
        %v819 = vpop.trf.xlu0
        %v820 = vpop.trf.xlu0
        %v821 = vpop.trf.xlu0
        %v822 = vpop.trf.xlu0
        %vm823 = vcmask 27648
        %824 = vst.msk [vmem:[%s177] sm:$0xf] %vm823, %v711
        %825 = vst.msk [vmem:[%s177 + $0x4] sm:$0xf] %vm823, %v743
        %826 = vst.msk [vmem:[%s177 + $0x8] sm:$0xf] %vm823, %v775
        %827 = vst.msk [vmem:[%s177 + $0xc] sm:$0xf] %vm823, %v807
        %s828 = sand.u32 %s54, 1
        %s829 = scalar_lea.sflag [#allocation5], %s828
        %s830 = sand.u32 %s54, 1
        %s831 = smul.addr %s830, 32
        %s832 = scalar_lea.vmem [#allocation6], %s831
        %s833 = smul.u32 4, %s20
        %p834 = scmp.lt.s32.totalorder %s833, 7
        %s835 = scalar_select %p834, %s833, 7
        %s836 = smul.addr %s835, 4
        %s837 = scalar_lea.vmem %s2, %s836
        // Predicated region
        $region29: #{tpu_custom_call.1} parent=23 // pred_check
          %p838 = pneg %p64
        $region30: #{tpu_custom_call.1} parent=23 // pred_check_branch
          %840 = sbr.rel (%p838) target = $region32
        $region31: #{tpu_custom_call.1} parent=23 // pred_region
          %s841 = smul.u32 4, %s20
          %s843 = ssub.s32 512, 512
          %844 = vsyncadd %s829, %s843
          %s845 = smul.addr %s841, 128
          %s846 = scalar_lea.hbm %s1, %s845
          %s847 = sshll.u32 %s832, 4
          %s848 = int_to_ptr.vmem [resolvable:$true] %s847
          %853 = dma.vmem_to_hbm [thread:$0]  %s848, 512, %s846, %s829, 128, 128, 8
        $region32: #{tpu_custom_call.1} parent=23 // pred_fallthru
          _
        // Predicated region
        $region33: #{tpu_custom_call.1} parent=23 // pred_check
          %p854 = pneg %p90
        $region34: #{tpu_custom_call.1} parent=23 // pred_check_branch
          %856 = sbr.rel (%p854) target = $region36
        $region35: #{tpu_custom_call.1} parent=23 // pred_region
          %s857 = smul.u32 4, %s20
        $region36: #{tpu_custom_call.1} parent=23 // pred_fallthru
          _
      $region24: #{tpu_custom_call.1} parent=5 // pred_fallthru
        _
      %p858 = scmp.le.s32.totalorder 2, %s15
      // Predicated region
      $region37: #{tpu_custom_call.1} parent=5 // pred_check
        %p859 = pneg %p858
      $region38: #{tpu_custom_call.1} parent=5 // pred_check_branch
        %861 = sbr.rel (%p859) target = $region40
      $region39: #{tpu_custom_call.1} parent=5 // pred_region
        %s862 = ssub.s32 %s15, 2
        // Predicated region
        $region41: #{tpu_custom_call.1} parent=39 // pred_check
          %p863 = pneg %p70
        $region42: #{tpu_custom_call.1} parent=39 // pred_check_branch
          %865 = sbr.rel (%p863) target = $region44
        $region43: #{tpu_custom_call.1} parent=39 // pred_region
          %s866 = sand.u32 %s55, 1
          %s867 = scalar_lea.sflag [#allocation5], %s866
          %s868 = sand.u32 %s55, 1
          %s869 = smul.addr %s868, 32
          %s870 = scalar_lea.vmem [#allocation6], %s869
          %871 = dma.done %s867, 512
        $region44: #{tpu_custom_call.1} parent=39 // pred_fallthru
          _
        // Predicated region
        $region45: #{tpu_custom_call.1} parent=39 // pred_check
          %p872 = pneg %p96
        $region46: #{tpu_custom_call.1} parent=39 // pred_check_branch
          %874 = sbr.rel (%p872) target = $region48
        $region47: #{tpu_custom_call.1} parent=39 // pred_region
          %s875 = smul.u32 4, %s21
          %p876 = scmp.lt.s32.totalorder %s875, 7
          %s877 = scalar_select %p876, %s875, 7
          %s878 = smul.addr %s877, 4
          %s879 = scalar_lea.vmem %s2, %s878
        $region48: #{tpu_custom_call.1} parent=39 // pred_fallthru
          _
      $region40: #{tpu_custom_call.1} parent=5 // pred_fallthru
        _
    $region6: #{tpu_custom_call.1} parent=1 // loop_footer
      %s19 = sadd.s32 1, %s15
    $region7: #{tpu_custom_call.1} parent=1 // loop_footer_branch
      %14 = sbr.rel target = $region3
    $region8: #{tpu_custom_call.1} parent=1 // loop_exit
      _
    %880 = vsyncpa [#allocation4], 1
    %s881 = scalar_lea.sflag [#allocation4], 1
    %882 = vsyncpa %s881, 1
    %883 = vsyncpa [#allocation5], 1
    %s884 = scalar_lea.sflag [#allocation5], 1
    %885 = vsyncpa %s884, 1

</llo_original>
